<compile_context>
chip_gen: v7x
topology: tpu7x:2x2x1
jax: 0.10.0
libtpu: 0.0.40
codegen_flags: <defaults>
</compile_context>

<pallas_src>
import jax
import jax.numpy as jnp
from jax import lax
from jax.experimental import pallas as pl
from jax.experimental.pallas import tpu as pltpu


_BLOCK_BYTES = 2 * 1024 * 1024   # target bytes for one (rows, tile) f32 block
_STATIC_UNROLL_MAX = 8           # fully unroll the chunk loop up to this many chunks
_FORI_UNROLL = 8                 # unroll factor for long chunk loops


def _pick_rows(nc: int) -> int:
    """Row-block size R for the [N*C, hw2] layout (fills the 8 f32 sublanes)."""
    if nc <= 32:
        return nc                      # full extent: always a legal block dim
    if nc % 8 == 0:
        for r in (32, 24, 16, 8):
            if nc % r == 0:
                return r
    return 8                           # ragged last row block; pipeline drops pad rows


def _pick_lane_tile(hw2: int, rows: int):
    """Lane tile T (and 128-lane chunk) so a (rows, T) f32 block is ~_BLOCK_BYTES."""
    cap = _BLOCK_BYTES // max(4 * rows, 1)
    cap = max(128, (cap // 128) * 128)
    if hw2 <= cap:
        tile = hw2                     # whole axis in one block (legal full-extent)
    else:
        tile = 0
        for t in range(cap, 127, -128):    # prefer an exact divisor: no ragged tile
            if hw2 % t == 0:
                tile = t
                break
        if tile == 0:
            tile = cap                 # ragged last tile (masked in the stats pass)
    chunk = 128 if tile % 128 == 0 else tile
    return tile, chunk


def _make_stats_kernel(tile: int, chunk: int, hw2: int, n_tiles: int):
    needs_mask = (hw2 % tile) != 0
    n_chunks = tile // chunk

    def stats_kernel(x_ref, o_ref, acc_s, acc_q):
        t = pl.program_id(1)

        @pl.when(t == 0)
        def _():
            acc_s[...] = jnp.zeros_like(acc_s)
            acc_q[...] = jnp.zeros_like(acc_q)

        def do_chunk(start, s, q, masked):
            # Per-chunk ref load: keeps live ranges to a few vregs (no spills).
            xj = x_ref[:, pl.ds(start, chunk)].astype(jnp.float32)
            if masked:
                lane = lax.broadcasted_iota(jnp.int32, xj.shape, 1)
                xj = jnp.where(lane + start + t * tile < hw2, xj, 0.0)
            return s + xj, q + xj * xj

        def accumulate(masked):
            s, q = acc_s[...], acc_q[...]
            if n_chunks <= _STATIC_UNROLL_MAX:
                for j in range(n_chunks):
                    s, q = do_chunk(j * chunk, s, q, masked)
            else:
                def body(j, carry):
                    start = pl.multiple_of(j * chunk, 128)
                    return do_chunk(start, carry[0], carry[1], masked)
                s, q = lax.fori_loop(0, n_chunks, body, (s, q),
                                     unroll=_FORI_UNROLL)
            acc_s[...] = s
            acc_q[...] = q

        if needs_mask:
            # Only the last (ragged) tile pays for the lane mask.
            @pl.when(t < n_tiles - 1)
            def _():
                accumulate(False)

            @pl.when(t == n_tiles - 1)
            def _():
                accumulate(True)
        else:
            accumulate(False)

        @pl.when(t == n_tiles - 1)
        def _():
            # One cross-lane (XLU) reduce per row block, split by lane parity.
            lane = lax.broadcasted_iota(jnp.int32, acc_s.shape, 1)
            even = (lane % 2) == 0
            sf = acc_s[...]
            qf = acc_q[...]
            o_ref[:, 0:1] = jnp.sum(jnp.where(even, sf, 0.0), axis=1, keepdims=True)
            o_ref[:, 1:2] = jnp.sum(jnp.where(even, 0.0, sf), axis=1, keepdims=True)
            o_ref[:, 2:3] = jnp.sum(jnp.where(even, qf, 0.0), axis=1, keepdims=True)
            o_ref[:, 3:4] = jnp.sum(jnp.where(even, 0.0, qf), axis=1, keepdims=True)

    return stats_kernel


def _make_norm_kernel(tile: int, chunk: int):
    n_chunks = tile // chunk

    def norm_kernel(x_ref, scale_ref, shift_ref, o_ref):
        # Lane-parity scale/shift pre-expanded on the host: inner loop is mul+add
        # with full 128-lane-wide loads/stores.
        sc = scale_ref[...]            # (rows, chunk) f32
        sh = shift_ref[...]

        def do_chunk(start):
            xj = x_ref[:, pl.ds(start, chunk)].astype(jnp.float32)
            o_ref[:, pl.ds(start, chunk)] = (xj * sc + sh).astype(o_ref.dtype)

        if n_chunks <= _STATIC_UNROLL_MAX:
            for j in range(n_chunks):
                do_chunk(j * chunk)
        else:
            def body(j, carry):
                do_chunk(pl.multiple_of(j * chunk, 128))
                return carry
            lax.fori_loop(0, n_chunks, body, 0, unroll=_FORI_UNROLL)

    return norm_kernel


def complex_batchnorm2d(x, weight, bias, eps=1e-5):
    """x: [N, C, H, W, 2]. weight, bias: [2, C] (row 0 = real BN, row 1 = imag BN)."""
    N, C, H, W, two = x.shape
    assert two == 2
    hw2 = H * W * 2
    cnt = N * H * W
    nc = N * C

    # Free reshape (contiguous trailing-dim merges): rows = (n, c) pairs,
    # lanes = interleaved real/imag (even lane = real, odd lane = imag).
    x_r = x.reshape(nc, hw2)

    rows = _pick_rows(nc)
    tile, chunk = _pick_lane_tile(hw2, rows)
    n_tiles = pl.cdiv(hw2, tile)
    n_row_blocks = pl.cdiv(nc, rows)

    # ---- pass 1: per-(n, c) partial sums / sums-of-squares, split re/im -------
    partials = pl.pallas_call(
        _make_stats_kernel(tile, chunk, hw2, n_tiles),
        out_shape=jax.ShapeDtypeStruct((nc, 4), jnp.float32),
        grid_spec=pltpu.PrefetchScalarGridSpec(
            num_scalar_prefetch=0,
            grid=(n_row_blocks, n_tiles),
            in_specs=[pl.BlockSpec((rows, tile), lambda r, t: (r, t))],
            out_specs=pl.BlockSpec((rows, 4), lambda r, t: (r, 0)),
            scratch_shapes=[pltpu.VMEM((rows, chunk), jnp.float32),
                            pltpu.VMEM((rows, chunk), jnp.float32)],
        ),
        compiler_params=pltpu.CompilerParams(
            dimension_semantics=("parallel", "arbitrary")),
    )(x_r)

    # ---- tiny per-channel math (O(C) f32, outside the kernels) ----------------
    stats = jnp.sum(partials.reshape(N, C, 4), axis=0)   # (C, 4): s_re, s_im, q_re, q_im
    mean = stats[:, 0:2] / cnt                           # (C, 2)
    ex2 = stats[:, 2:4] / cnt
    # TODO(synk): E[x^2] - mean^2 can lose precision when |mean| >> std; a shifted /
    # Welford accumulation would match PyTorch's centered variance more closely.
    var = jnp.maximum(ex2 - mean * mean, 0.0)            # biased var; guard cancellation
    inv_std = lax.rsqrt(var + eps)
    w = jnp.transpose(weight).astype(jnp.float32)        # (C, 2)
    b = jnp.transpose(bias).astype(jnp.float32)
    scale = inv_std * w                                  # (C, 2)
    shift = b - mean * scale                             # (C, 2)

    # Lane-expanded per-row scale/shift (even lane = real, odd = imag), one row per
    # (n, c) pair. O(N*C*chunk) host-side work, hoisted out of the streaming pass.
    even = (jnp.arange(chunk) % 2 == 0)[None, :]
    scale_lane = jnp.where(even, scale[:, 0:1], scale[:, 1:2])   # (C, chunk)
    shift_lane = jnp.where(even, shift[:, 0:1], shift[:, 1:2])
    scale_exp = jnp.tile(scale_lane, (N, 1))                     # (nc, chunk)
    shift_exp = jnp.tile(shift_lane, (N, 1))

    # ---- pass 2: streaming normalize, y = x * scale + shift -------------------
    out_r = pl.pallas_call(
        _make_norm_kernel(tile, chunk),
        out_shape=jax.ShapeDtypeStruct((nc, hw2), x.dtype),
        grid_spec=pltpu.PrefetchScalarGridSpec(
            num_scalar_prefetch=0,
            grid=(n_row_blocks, n_tiles),
            in_specs=[pl.BlockSpec((rows, tile), lambda r, t: (r, t)),
                      pl.BlockSpec((rows, chunk), lambda r, t: (r, 0)),
                      pl.BlockSpec((rows, chunk), lambda r, t: (r, 0))],
            out_specs=pl.BlockSpec((rows, tile), lambda r, t: (r, t)),
        ),
        compiler_params=pltpu.CompilerParams(
            dimension_semantics=("parallel", "parallel")),
    )(x_r, scale_exp, shift_exp)

    return out_r.reshape(N, C, H, W, 2)


def _reference(x, weight, bias, eps=1e-5):
    """Pure-JAX reference of the PyTorch forward (training mode)."""
    outs = []
    for comp in range(2):
        xc = x[..., comp]  # [N, C, H, W]
        mean = jnp.mean(xc, axis=(0, 2, 3), keepdims=True)
        var = jnp.mean((xc - mean) ** 2, axis=(0, 2, 3), keepdims=True)
        y = (xc - mean) / jnp.sqrt(var + eps)
        y = y * weight[comp][None, :, None, None] + bias[comp][None, :, None, None]
        outs.append(y)
    return jnp.stack(outs, axis=-1)


if __name__ == "__main__":
    N, C, H, W = 2, 4, 16, 16
    key = jax.random.PRNGKey(0)
    x = jax.random.normal(key, (N, C, H, W, 2), dtype=jnp.float32)

    # Deterministic, nontrivial affine params (PyTorch default is w=1, b=0).
    weight = jnp.stack(
        [1.0 + 0.1 * jnp.arange(C, dtype=jnp.float32),
         1.0 - 0.05 * jnp.arange(C, dtype=jnp.float32)], axis=0)  # [2, C]
    bias = jnp.stack(
        [0.01 * jnp.arange(C, dtype=jnp.float32),
         -0.02 * jnp.arange(C, dtype=jnp.float32)], axis=0)       # [2, C]

    out = jax.jit(complex_batchnorm2d)(x, weight, bias)
    out = jax.block_until_ready(out)

    ref = _reference(x, weight, bias, eps=1e-5)
    assert out.shape == (N, C, H, W, 2)
    assert jnp.allclose(out, ref, atol=1e-4, rtol=1e-4)

    print("KERNEL_OK")
</pallas_src>

<mosaic_0001>
module attributes {stable_mosaic.version = 11 : i64} {
  func.func @stats_kernel(%arg0: i32, %arg1: i32, %arg2: memref<8x512xf32, #tpu.memory_space<vmem>>, %arg3: memref<8x4xf32, #tpu.memory_space<vmem>>, %arg4: memref<8x128xf32, #tpu.memory_space<vmem>>, %arg5: memref<8x128xf32, #tpu.memory_space<vmem>>) attributes {dimension_semantics = [#tpu.dimension_semantics<parallel>, #tpu.dimension_semantics<arbitrary>], iteration_bounds = array<i64: 1, 1>, scalar_prefetch = 0 : i64, scratch_operands = 2 : i64, tpu.core_type = #tpu.core_type<tc>, window_params = [{transform_indices = @transform_0, window_bounds = array<i64: 8, 512>}, {transform_indices = @transform_1, window_bounds = array<i64: 8, 4>}]} {
    %c0_i32 = arith.constant 0 : i32
    %0 = arith.cmpi eq, %arg1, %c0_i32 : i32
    %1 = arith.extui %0 : i1 to i32
    %c0_i32_0 = arith.constant 0 : i32
    %2 = arith.cmpi ne, %1, %c0_i32_0 : i32
    scf.if %2 {
      %cst = arith.constant 0.000000e+00 : f32
      %26 = vector.broadcast %cst : f32 to vector<8x128xf32>
      %c0_15 = arith.constant 0 : index
      %c0_16 = arith.constant 0 : index
      %27 = vector.load %arg4[%c0_15, %c0_16] : memref<8x128xf32, #tpu.memory_space<vmem>>, vector<8x128xf32>
      tpu.vector_store %arg4[%c0_15, %c0_16], %26 {strides = array<i32>} : memref<8x128xf32, #tpu.memory_space<vmem>>, vector<8x128xf32>,
      %cst_17 = arith.constant 0.000000e+00 : f32
      %28 = vector.broadcast %cst_17 : f32 to vector<8x128xf32>
      %c0_18 = arith.constant 0 : index
      %c0_19 = arith.constant 0 : index
      %29 = vector.load %arg5[%c0_18, %c0_19] : memref<8x128xf32, #tpu.memory_space<vmem>>, vector<8x128xf32>
      tpu.vector_store %arg5[%c0_18, %c0_19], %28 {strides = array<i32>} : memref<8x128xf32, #tpu.memory_space<vmem>>, vector<8x128xf32>,
    } else {
    }
    %c0 = arith.constant 0 : index
    %c0_1 = arith.constant 0 : index
    %3 = vector.load %arg4[%c0, %c0_1] : memref<8x128xf32, #tpu.memory_space<vmem>>, vector<8x128xf32>
    %c0_2 = arith.constant 0 : index
    %c0_3 = arith.constant 0 : index
    %4 = vector.load %arg5[%c0_2, %c0_3] : memref<8x128xf32, #tpu.memory_space<vmem>>, vector<8x128xf32>
    %c0_4 = arith.constant 0 : index
    %c0_5 = arith.constant 0 : index
    %5 = vector.load %arg2[%c0_4, %c0_5] : memref<8x512xf32, #tpu.memory_space<vmem>>, vector<8x128xf32>
    %6 = arith.addf %3, %5 : vector<8x128xf32>
    %7 = arith.mulf %5, %5 : vector<8x128xf32>
    %8 = arith.addf %4, %7 : vector<8x128xf32>
    %c0_6 = arith.constant 0 : index
    %c128 = arith.constant 128 : index
    %9 = vector.load %arg2[%c0_6, %c128] : memref<8x512xf32, #tpu.memory_space<vmem>>, vector<8x128xf32>
    %10 = arith.addf %6, %9 : vector<8x128xf32>
    %11 = arith.mulf %9, %9 : vector<8x128xf32>
    %12 = arith.addf %8, %11 : vector<8x128xf32>
    %c0_7 = arith.constant 0 : index
    %c256 = arith.constant 256 : index
    %13 = vector.load %arg2[%c0_7, %c256] : memref<8x512xf32, #tpu.memory_space<vmem>>, vector<8x128xf32>
    %14 = arith.addf %10, %13 : vector<8x128xf32>
    %15 = arith.mulf %13, %13 : vector<8x128xf32>
    %16 = arith.addf %12, %15 : vector<8x128xf32>
    %c0_8 = arith.constant 0 : index
    %c384 = arith.constant 384 : index
    %17 = vector.load %arg2[%c0_8, %c384] : memref<8x512xf32, #tpu.memory_space<vmem>>, vector<8x128xf32>
    %18 = arith.addf %14, %17 : vector<8x128xf32>
    %19 = arith.mulf %17, %17 : vector<8x128xf32>
    %20 = arith.addf %16, %19 : vector<8x128xf32>
    %c0_9 = arith.constant 0 : index
    %c0_10 = arith.constant 0 : index
    %21 = vector.load %arg4[%c0_9, %c0_10] : memref<8x128xf32, #tpu.memory_space<vmem>>, vector<8x128xf32>
    tpu.vector_store %arg4[%c0_9, %c0_10], %18 {strides = array<i32>} : memref<8x128xf32, #tpu.memory_space<vmem>>, vector<8x128xf32>,
    %c0_11 = arith.constant 0 : index
    %c0_12 = arith.constant 0 : index
    %22 = vector.load %arg5[%c0_11, %c0_12] : memref<8x128xf32, #tpu.memory_space<vmem>>, vector<8x128xf32>
    tpu.vector_store %arg5[%c0_11, %c0_12], %20 {strides = array<i32>} : memref<8x128xf32, #tpu.memory_space<vmem>>, vector<8x128xf32>,
    %c0_i32_13 = arith.constant 0 : i32
    %23 = arith.cmpi eq, %arg1, %c0_i32_13 : i32
    %24 = arith.extui %23 : i1 to i32
    %c0_i32_14 = arith.constant 0 : i32
    %25 = arith.cmpi ne, %24, %c0_i32_14 : i32
    scf.if %25 {
      %26 = tpu.iota {dimensions = array<i32: 1>} : vector<8x128xi32>
      %c2_i32 = arith.constant 2 : i32
      %c0_i32_15 = arith.constant 0 : i32
      %27 = arith.cmpi eq, %c2_i32, %c0_i32_15 : i32
      %c1_i32 = arith.constant 1 : i32
      %28 = arith.select %27, %c1_i32, %c2_i32 : i32
      %29 = vector.broadcast %28 : i32 to vector<8x128xi32>
      %30 = arith.remsi %26, %29 : vector<8x128xi32>
      %c0_i32_16 = arith.constant 0 : i32
      %31 = vector.broadcast %c0_i32_16 : i32 to vector<8x128xi32>
      %32 = arith.cmpi ne, %30, %31 : vector<8x128xi32>
      %c0_i32_17 = arith.constant 0 : i32
      %33 = vector.broadcast %c0_i32_17 : i32 to vector<8x128xi32>
      %34 = arith.cmpi slt, %30, %33 : vector<8x128xi32>
      %c0_i32_18 = arith.constant 0 : i32
      %35 = arith.cmpi slt, %28, %c0_i32_18 : i32
      %36 = vector.broadcast %35 : i1 to vector<8x128xi1>
      %37 = vector.broadcast %36 : vector<8x128xi1> to vector<8x128xi1>
      %38 = arith.xori %34, %37 : vector<8x128xi1>
      %39 = arith.andi %38, %32 : vector<8x128xi1>
      %40 = vector.broadcast %28 : i32 to vector<8x128xi32>
      %41 = arith.addi %30, %40 : vector<8x128xi32>
      %42 = arith.select %39, %41, %30 : vector<8x128xi1>, vector<8x128xi32>
      %c0_i32_19 = arith.constant 0 : i32
      %43 = vector.broadcast %c0_i32_19 : i32 to vector<8x128xi32>
      %44 = arith.cmpi eq, %42, %43 : vector<8x128xi32>
      %c0_20 = arith.constant 0 : index
      %c0_21 = arith.constant 0 : index
      %45 = vector.load %arg4[%c0_20, %c0_21] : memref<8x128xf32, #tpu.memory_space<vmem>>, vector<8x128xf32>
      %c0_22 = arith.constant 0 : index
      %c0_23 = arith.constant 0 : index
      %46 = vector.load %arg5[%c0_22, %c0_23] : memref<8x128xf32, #tpu.memory_space<vmem>>, vector<8x128xf32>
      %cst = arith.constant 0.000000e+00 : f32
      %47 = vector.broadcast %cst : f32 to vector<8x128xf32>
      %48 = arith.select %44, %45, %47 : vector<8x128xi1>, vector<8x128xf32>
      %cst_24 = arith.constant dense<0.000000e+00> : vector<8xf32>
      %49 = vector.multi_reduction <add>, %48, %cst_24 [1] : vector<8x128xf32> to vector<8xf32>
      %50 = vector.shape_cast %49 : vector<8xf32> to vector<8x1xf32>
      %c0_25 = arith.constant 0 : index
      %c0_26 = arith.constant 0 : index
      %51 = vector.load %arg3[%c0_25, %c0_26] : memref<8x4xf32, #tpu.memory_space<vmem>>, vector<8x1xf32>
      tpu.vector_store %arg3[%c0_25, %c0_26], %50 {strides = array<i32>} : memref<8x4xf32, #tpu.memory_space<vmem>>, vector<8x1xf32>,
      %cst_27 = arith.constant 0.000000e+00 : f32
      %52 = vector.broadcast %cst_27 : f32 to vector<8x128xf32>
      %53 = arith.select %44, %52, %45 : vector<8x128xi1>, vector<8x128xf32>
      %cst_28 = arith.constant dense<0.000000e+00> : vector<8xf32>
      %54 = vector.multi_reduction <add>, %53, %cst_28 [1] : vector<8x128xf32> to vector<8xf32>
      %55 = vector.shape_cast %54 : vector<8xf32> to vector<8x1xf32>
      %c0_29 = arith.constant 0 : index
      %c1 = arith.constant 1 : index
      %56 = vector.load %arg3[%c0_29, %c1] : memref<8x4xf32, #tpu.memory_space<vmem>>, vector<8x1xf32>
      tpu.vector_store %arg3[%c0_29, %c1], %55 {strides = array<i32>} : memref<8x4xf32, #tpu.memory_space<vmem>>, vector<8x1xf32>,
      %cst_30 = arith.constant 0.000000e+00 : f32
      %57 = vector.broadcast %cst_30 : f32 to vector<8x128xf32>
      %58 = arith.select %44, %46, %57 : vector<8x128xi1>, vector<8x128xf32>
      %cst_31 = arith.constant dense<0.000000e+00> : vector<8xf32>
      %59 = vector.multi_reduction <add>, %58, %cst_31 [1] : vector<8x128xf32> to vector<8xf32>
      %60 = vector.shape_cast %59 : vector<8xf32> to vector<8x1xf32>
      %c0_32 = arith.constant 0 : index
      %c2 = arith.constant 2 : index
      %61 = vector.load %arg3[%c0_32, %c2] : memref<8x4xf32, #tpu.memory_space<vmem>>, vector<8x1xf32>
      tpu.vector_store %arg3[%c0_32, %c2], %60 {strides = array<i32>} : memref<8x4xf32, #tpu.memory_space<vmem>>, vector<8x1xf32>,
      %cst_33 = arith.constant 0.000000e+00 : f32
      %62 = vector.broadcast %cst_33 : f32 to vector<8x128xf32>
      %63 = arith.select %44, %62, %46 : vector<8x128xi1>, vector<8x128xf32>
      %cst_34 = arith.constant dense<0.000000e+00> : vector<8xf32>
      %64 = vector.multi_reduction <add>, %63, %cst_34 [1] : vector<8x128xf32> to vector<8xf32>
      %65 = vector.shape_cast %64 : vector<8xf32> to vector<8x1xf32>
      %c0_35 = arith.constant 0 : index
      %c3 = arith.constant 3 : index
      %66 = vector.load %arg3[%c0_35, %c3] : memref<8x4xf32, #tpu.memory_space<vmem>>, vector<8x1xf32>
      tpu.vector_store %arg3[%c0_35, %c3], %65 {strides = array<i32>} : memref<8x4xf32, #tpu.memory_space<vmem>>, vector<8x1xf32>,
    } else {
    }
    return
  }
  func.func @transform_0(%arg0: i32, %arg1: i32) -> (i32, i32) {
    %c0_i32 = arith.constant 0 : i32
    return %arg0, %arg1 : i32, i32
  }
  func.func @transform_1(%arg0: i32, %arg1: i32) -> (i32, i32) {
    %c0_i32 = arith.constant 0 : i32
    %c0_i32_0 = arith.constant 0 : i32
    return %arg0, %c0_i32 : i32, i32
  }
}

module attributes {stable_mosaic.version = 11 : i64} {
  func.func @norm_kernel(%arg0: i32, %arg1: i32, %arg2: memref<8x512xf32, #tpu.memory_space<vmem>>, %arg3: memref<8x128xf32, #tpu.memory_space<vmem>>, %arg4: memref<8x128xf32, #tpu.memory_space<vmem>>, %arg5: memref<8x512xf32, #tpu.memory_space<vmem>>) attributes {dimension_semantics = [#tpu.dimension_semantics<parallel>, #tpu.dimension_semantics<parallel>], iteration_bounds = array<i64: 1, 1>, scalar_prefetch = 0 : i64, scratch_operands = 0 : i64, tpu.core_type = #tpu.core_type<tc>, window_params = [{transform_indices = @transform_0, window_bounds = array<i64: 8, 512>}, {transform_indices = @transform_1, window_bounds = array<i64: 8, 128>}, {transform_indices = @transform_2, window_bounds = array<i64: 8, 128>}, {transform_indices = @transform_3, window_bounds = array<i64: 8, 512>}]} {
    %c0 = arith.constant 0 : index
    %c0_0 = arith.constant 0 : index
    %0 = vector.load %arg3[%c0, %c0_0] : memref<8x128xf32, #tpu.memory_space<vmem>>, vector<8x128xf32>
    %c0_1 = arith.constant 0 : index
    %c0_2 = arith.constant 0 : index
    %1 = vector.load %arg4[%c0_1, %c0_2] : memref<8x128xf32, #tpu.memory_space<vmem>>, vector<8x128xf32>
    %c0_3 = arith.constant 0 : index
    %c0_4 = arith.constant 0 : index
    %2 = vector.load %arg2[%c0_3, %c0_4] : memref<8x512xf32, #tpu.memory_space<vmem>>, vector<8x128xf32>
    %3 = arith.mulf %2, %0 : vector<8x128xf32>
    %4 = arith.addf %3, %1 : vector<8x128xf32>
    %c0_5 = arith.constant 0 : index
    %c0_6 = arith.constant 0 : index
    %5 = vector.load %arg5[%c0_5, %c0_6] : memref<8x512xf32, #tpu.memory_space<vmem>>, vector<8x128xf32>
    tpu.vector_store %arg5[%c0_5, %c0_6], %4 {strides = array<i32>} : memref<8x512xf32, #tpu.memory_space<vmem>>, vector<8x128xf32>,
    %c0_7 = arith.constant 0 : index
    %c128 = arith.constant 128 : index
    %6 = vector.load %arg2[%c0_7, %c128] : memref<8x512xf32, #tpu.memory_space<vmem>>, vector<8x128xf32>
    %7 = arith.mulf %6, %0 : vector<8x128xf32>
    %8 = arith.addf %7, %1 : vector<8x128xf32>
    %c0_8 = arith.constant 0 : index
    %c128_9 = arith.constant 128 : index
    %9 = vector.load %arg5[%c0_8, %c128_9] : memref<8x512xf32, #tpu.memory_space<vmem>>, vector<8x128xf32>
    tpu.vector_store %arg5[%c0_8, %c128_9], %8 {strides = array<i32>} : memref<8x512xf32, #tpu.memory_space<vmem>>, vector<8x128xf32>,
    %c0_10 = arith.constant 0 : index
    %c256 = arith.constant 256 : index
    %10 = vector.load %arg2[%c0_10, %c256] : memref<8x512xf32, #tpu.memory_space<vmem>>, vector<8x128xf32>
    %11 = arith.mulf %10, %0 : vector<8x128xf32>
    %12 = arith.addf %11, %1 : vector<8x128xf32>
    %c0_11 = arith.constant 0 : index
    %c256_12 = arith.constant 256 : index
    %13 = vector.load %arg5[%c0_11, %c256_12] : memref<8x512xf32, #tpu.memory_space<vmem>>, vector<8x128xf32>
    tpu.vector_store %arg5[%c0_11, %c256_12], %12 {strides = array<i32>} : memref<8x512xf32, #tpu.memory_space<vmem>>, vector<8x128xf32>,
    %c0_13 = arith.constant 0 : index
    %c384 = arith.constant 384 : index
    %14 = vector.load %arg2[%c0_13, %c384] : memref<8x512xf32, #tpu.memory_space<vmem>>, vector<8x128xf32>
    %15 = arith.mulf %14, %0 : vector<8x128xf32>
    %16 = arith.addf %15, %1 : vector<8x128xf32>
    %c0_14 = arith.constant 0 : index
    %c384_15 = arith.constant 384 : index
    %17 = vector.load %arg5[%c0_14, %c384_15] : memref<8x512xf32, #tpu.memory_space<vmem>>, vector<8x128xf32>
    tpu.vector_store %arg5[%c0_14, %c384_15], %16 {strides = array<i32>} : memref<8x512xf32, #tpu.memory_space<vmem>>, vector<8x128xf32>,
    return
  }
  func.func @transform_0(%arg0: i32, %arg1: i32) -> (i32, i32) {
    %c0_i32 = arith.constant 0 : i32
    return %arg0, %arg1 : i32, i32
  }
  func.func @transform_1(%arg0: i32, %arg1: i32) -> (i32, i32) {
    %c0_i32 = arith.constant 0 : i32
    %c0_i32_0 = arith.constant 0 : i32
    return %arg0, %c0_i32 : i32, i32
  }
  func.func @transform_2(%arg0: i32, %arg1: i32) -> (i32, i32) {
    %c0_i32 = arith.constant 0 : i32
    %c0_i32_0 = arith.constant 0 : i32
    return %arg0, %c0_i32 : i32, i32
  }
  func.func @transform_3(%arg0: i32, %arg1: i32) -> (i32, i32) {
    %c0_i32 = arith.constant 0 : i32
    return %arg0, %arg1 : i32, i32
  }
}

</mosaic_0001>

<llo_original>
// kernel: complex_batchnorm2d.2
$region0: #{complex_batchnorm2d.2}
  #allocation0 [shape = 'u32[]', space=smem, size = 0x4, offset = 0x4, fixed_abs, tag = 'smem constant byte address 0x4 - core index']
  #allocation1 [shape = 'u32[144,128]{1,0:T(1,128)}', space=vmem, size = 0x12000, scoped, tag = 'internal scratch']
  #allocation2 [shape = 'f32[8,128]{1,0:T(8,128)}', space=vmem, size = 0x1000, scoped, tag = 'scratch operand']
  #allocation3 [shape = 'f32[8,128]{1,0:T(8,128)}', space=vmem, size = 0x1000, scoped, tag = 'scratch operand']
  %s0 = inlined_call_operand.vmem [shape: f32[8,512], index: 0, kind: input, shape index: {}]
  %s1 = inlined_call_operand.vmem [shape: f32[8,4], index: 1, kind: output, shape index: {}]
  %s2 = sld [smem:[#allocation0]]
  $region22: #{complex_batchnorm2d.2} parent=0
    _
  %s4 = ssub.s32 1, %s2
  %s5 = scalar_select 0, %s4, %s2
  // Predicated region
  $region2: #{complex_batchnorm2d.2} parent=0 // pred_check
    _
  $region3: #{complex_batchnorm2d.2} parent=0 // pred_check_branch
    %7 = sbr.rel (0) target = $region5
  $region4: #{complex_batchnorm2d.2} parent=0 // pred_region
    _
  $region5: #{complex_batchnorm2d.2} parent=0 // pred_fallthru
    _
  %p8 = scmp.eq.s32.totalorder 0, 0
  // Predicated region
  $region6: #{complex_batchnorm2d.2} parent=0 // pred_check
    %p9 = pneg %p8
  $region7: #{complex_batchnorm2d.2} parent=0 // pred_check_branch
    %11 = sbr.rel (%p9) target = $region9
  $region8: #{complex_batchnorm2d.2} parent=0 // pred_region
    %12 = vst [vmem:[#allocation2] sm:$0xff] 0.0
    %13 = vst [vmem:[#allocation3] sm:$0xff] 0.0
  $region9: #{complex_batchnorm2d.2} parent=0 // pred_fallthru
    _
  %v14 = vld [vmem:[#allocation2] sm:$0xff]
  %v15 = vld [vmem:[#allocation3] sm:$0xff]
  %v16 = vld [vmem:[%s0] sm:$0xff]
  %v17 = vadd.f32 %v14, %v16
  %v18 = vmul.f32 %v16, %v16
  %v19 = vadd.f32 %v15, %v18
  %v20 = vld [vmem:[%s0 + $0x8] sm:$0xff]
  %v21 = vadd.f32 %v17, %v20
  %v22 = vmul.f32 %v20, %v20
  %v23 = vadd.f32 %v19, %v22
  %v24 = vld [vmem:[%s0 + $0x10] sm:$0xff]
  %v25 = vadd.f32 %v21, %v24
  %v26 = vmul.f32 %v24, %v24
  %v27 = vadd.f32 %v23, %v26
  %v28 = vld [vmem:[%s0 + $0x18] sm:$0xff]
  %v29 = vadd.f32 %v25, %v28
  %v30 = vmul.f32 %v28, %v28
  %v31 = vadd.f32 %v27, %v30
  %32 = vst [vmem:[#allocation2] sm:$0xff] %v29
  %33 = vst [vmem:[#allocation3] sm:$0xff] %v31
  // Predicated region
  $region10: #{complex_batchnorm2d.2} parent=0 // pred_check
    %p34 = pneg %p8
  $region11: #{complex_batchnorm2d.2} parent=0 // pred_check_branch
    %36 = sbr.rel (%p34) target = $region13
  $region12: #{complex_batchnorm2d.2} parent=0 // pred_region
    %v37 = vlaneseq
    %v38 = vand.u32 %v37, 127
    %vm39 = vcmp.lt.s32.totalorder %v38, 0
    %v40 = vsub.s32 0, %v38
    %v41 = vsel %vm39, %v40, %v38
    %v42 = vshrl.u32 %v41, 1
    %v43 = vand.u32 %v41, 1
    %v44 = vsub.s32 0, %v43
    %v45 = vsel %vm39, %v44, %v43
    %vm46 = vcmp.ne.s32.totalorder %v45, 0
    %vm47 = vcmp.lt.s32.totalorder %v45, 0
    %vm48 = vmand %vm47, %vm46
    %v49 = vadd.s32 %v45, 2
    %v50 = vsel %vm48, %v49, %v45
    %vm51 = vcmp.eq.s32.totalorder %v50, 0
    %v52 = vld [vmem:[#allocation2] sm:$0xff]
    %v53 = vld [vmem:[#allocation3] sm:$0xff]
    %v54 = vsel %vm51, %v52, 0.0
    %55 = vadd.xlane.f32.xlu0 %v54
    %v56 = vpop.xlane.xlu0 %55
    %vm57 = vcmask 7168
    %58 = vst.msk [vmem:[%s1] sm:$0xff] %vm57, %v56
    %v59 = vsel %vm51, 0.0, %v52
    %60 = vadd.xlane.f32.xlu0 %v59
    %v61 = vpop.xlane.xlu0 %60
    %vm62 = vcmask 15368
    %63 = vst.msk [vmem:[%s1] sm:$0xff] %vm62, %v61
    %v64 = vsel %vm51, %v53, 0.0
    %65 = vadd.xlane.f32.xlu0 %v64
    %v66 = vpop.xlane.xlu0 %65
    %vm67 = vcmask 23568
    %68 = vst.msk [vmem:[%s1] sm:$0xff] %vm67, %v66
    %v69 = vsel %vm51, 0.0, %v53
    %70 = vadd.xlane.f32.xlu0 %v69
    %v71 = vpop.xlane.xlu0 %70
    %vm72 = vcmask 31768
    %73 = vst.msk [vmem:[%s1] sm:$0xff] %vm72, %v71
  $region13: #{complex_batchnorm2d.2} parent=0 // pred_fallthru
    _
  // Predicated region
  $region14: #{complex_batchnorm2d.2} parent=0 // pred_check
    _
  $region15: #{complex_batchnorm2d.2} parent=0 // pred_check_branch
    %75 = sbr.rel (0) target = $region17
  $region16: #{complex_batchnorm2d.2} parent=0 // pred_region
    _
  $region17: #{complex_batchnorm2d.2} parent=0 // pred_fallthru
    _
  // Predicated region
  $region18: #{complex_batchnorm2d.2} parent=0 // pred_check
    _
  $region19: #{complex_batchnorm2d.2} parent=0 // pred_check_branch
    %77 = sbr.rel (0) target = $region21
  $region20: #{complex_batchnorm2d.2} parent=0 // pred_region
    _
  $region21: #{complex_batchnorm2d.2} parent=0 // pred_fallthru
    _

// kernel: complex_batchnorm2d.3
$region0: #{complex_batchnorm2d.3}
  #allocation0 [shape = 'u32[]', space=smem, size = 0x4, offset = 0x4, fixed_abs, tag = 'smem constant byte address 0x4 - core index']
  #allocation1 [shape = 'u32[144,128]{1,0:T(1,128)}', space=vmem, size = 0x12000, scoped, tag = 'internal scratch']
  %s0 = inlined_call_operand.vmem [shape: f32[8,512], index: 0, kind: input, shape index: {}]
  %s1 = inlined_call_operand.vmem [shape: f32[8,128], index: 1, kind: input, shape index: {}]
  %s2 = inlined_call_operand.vmem [shape: f32[8,128], index: 2, kind: input, shape index: {}]
  %s3 = inlined_call_operand.vmem [shape: f32[8,512], index: 3, kind: output, shape index: {}]
  %s4 = sld [smem:[#allocation0]]
  $region22: #{complex_batchnorm2d.3} parent=0
    _
  %s6 = ssub.s32 1, %s4
  %s7 = scalar_select 0, %s6, %s4
  // Predicated region
  $region2: #{complex_batchnorm2d.3} parent=0 // pred_check
    _
  $region3: #{complex_batchnorm2d.3} parent=0 // pred_check_branch
    %9 = sbr.rel (0) target = $region5
  $region4: #{complex_batchnorm2d.3} parent=0 // pred_region
    _
  $region5: #{complex_batchnorm2d.3} parent=0 // pred_fallthru
    _
  // Predicated region
  $region6: #{complex_batchnorm2d.3} parent=0 // pred_check
    _
  $region7: #{complex_batchnorm2d.3} parent=0 // pred_check_branch
    %11 = sbr.rel (0) target = $region9
  $region8: #{complex_batchnorm2d.3} parent=0 // pred_region
    _
  $region9: #{complex_batchnorm2d.3} parent=0 // pred_fallthru
    _
  // Predicated region
  $region10: #{complex_batchnorm2d.3} parent=0 // pred_check
    _
  $region11: #{complex_batchnorm2d.3} parent=0 // pred_check_branch
    %13 = sbr.rel (0) target = $region13
  $region12: #{complex_batchnorm2d.3} parent=0 // pred_region
    _
  $region13: #{complex_batchnorm2d.3} parent=0 // pred_fallthru
    _
  %v14 = vld [vmem:[%s1] sm:$0xff]
  %v15 = vld [vmem:[%s2] sm:$0xff]
  %v16 = vld [vmem:[%s0] sm:$0xff]
  %v17 = vmul.f32 %v16, %v14
  %v18 = vadd.f32 %v17, %v15
  %19 = vst [vmem:[%s3] sm:$0xff] %v18
  %v20 = vld [vmem:[%s0 + $0x8] sm:$0xff]
  %v21 = vmul.f32 %v20, %v14
  %v22 = vadd.f32 %v21, %v15
  %23 = vst [vmem:[%s3 + $0x8] sm:$0xff] %v22
  %v24 = vld [vmem:[%s0 + $0x10] sm:$0xff]
  %v25 = vmul.f32 %v24, %v14
  %v26 = vadd.f32 %v25, %v15
  %27 = vst [vmem:[%s3 + $0x10] sm:$0xff] %v26
  %v28 = vld [vmem:[%s0 + $0x18] sm:$0xff]
  %v29 = vmul.f32 %v28, %v14
  %v30 = vadd.f32 %v29, %v15
  %31 = vst [vmem:[%s3 + $0x18] sm:$0xff] %v30
  // Predicated region
  $region14: #{complex_batchnorm2d.3} parent=0 // pred_check
    _
  $region15: #{complex_batchnorm2d.3} parent=0 // pred_check_branch
    %33 = sbr.rel (0) target = $region17
  $region16: #{complex_batchnorm2d.3} parent=0 // pred_region
    _
  $region17: #{complex_batchnorm2d.3} parent=0 // pred_fallthru
    _
  // Predicated region
  $region18: #{complex_batchnorm2d.3} parent=0 // pred_check
    _
  $region19: #{complex_batchnorm2d.3} parent=0 // pred_check_branch
    %35 = sbr.rel (0) target = $region21
  $region20: #{complex_batchnorm2d.3} parent=0 // pred_region
    _
  $region21: #{complex_batchnorm2d.3} parent=0 // pred_fallthru
    _

</llo_original>
